<compile_context>
chip_gen: v7x
topology: tpu7x:2x2x1
jax: 0.10.0
libtpu: 0.0.40
codegen_flags: <defaults>
</compile_context>

<pallas_src>
import functools

import jax
import jax.numpy as jnp
from jax.experimental import pallas as pl
from jax.experimental.pallas import tpu as pltpu

_N_LEVELS = 7
_LANES = 128
_SUBLANES = 8
_TM_MAX = 1024  # rows per grid step; (1024,128) f32 = 512 KiB per input block


def _round_up(x, n):
    return ((x + n - 1) // n) * n


def _mae_partial_kernel(yh_ref, y_ref, out_ref, *, m_rows, tm, needs_mask):
    # Load in the stored dtype, upcast on the VPU (keeps HBM traffic minimal).
    yh = yh_ref[...].astype(jnp.float32)
    y = y_ref[...].astype(jnp.float32)

    # Discretizer(7): quantize prediction onto 7 evenly spaced levels in [0,1].
    scale = jnp.float32(_N_LEVELS - 1)
    disc = jnp.round(jnp.clip(yh, 0.0, 1.0) * scale) / scale
    err = jnp.abs(disc - y)

    if needs_mask:
        # Last grid block may extend past the array; zero out garbage rows.
        rows = pl.program_id(0) * tm + jax.lax.broadcasted_iota(
            jnp.int32, (tm, _LANES), 0)
        err = jnp.where(rows < m_rows, err, 0.0)

    # vreg-shaped partial sum: accumulation stays lane/sublane-wise on the VPU;
    # the expensive cross-lane reduction happens once, outside the kernel.
    out_ref[0] = jnp.sum(err.reshape(tm // _SUBLANES, _SUBLANES, _LANES), axis=0)


def mae_loss(y_hat, y, reduction="mean"):
    assert y_hat.shape == y.shape, "y_hat and y must have the same shape"
    if reduction not in ("mean", "sum"):
        raise ValueError(f"{reduction} is not a valid reduction")

    n_elems = y_hat.size

    # Keep HBM slabs in the caller's dtype (no wrapper-side upcast copy).
    flat_yh = jnp.ravel(y_hat)
    flat_y = jnp.ravel(y)

    # Zero-pad only to the minimal (8*128)-aligned length. Zero padding
    # contributes 0 to the sum (disc(0)=0, |0-0|=0). This copies only when
    # n_elems is not already a multiple of 1024.
    padded = _round_up(n_elems, _SUBLANES * _LANES)
    if padded != n_elems:
        flat_yh = jnp.pad(flat_yh, (0, padded - n_elems))
        flat_y = jnp.pad(flat_y, (0, padded - n_elems))

    m = padded // _LANES  # row count, multiple of 8
    yh2d = flat_yh.reshape(m, _LANES)  # contiguous reshape: no HBM copy
    y2d = flat_y.reshape(m, _LANES)

    tm = min(_TM_MAX, m)  # multiple of 8; equals full array dim when m small
    grid = pl.cdiv(m, tm)
    needs_mask = (grid * tm != m)  # static: only mask when Pallas pads rows

    kernel = functools.partial(
        _mae_partial_kernel, m_rows=m, tm=tm, needs_mask=needs_mask)

    bytes_in = (yh2d.dtype.itemsize + y2d.dtype.itemsize) * n_elems
    cost = pl.CostEstimate(
        flops=8 * n_elems,
        transcendentals=0,
        bytes_accessed=bytes_in + grid * _SUBLANES * _LANES * 4,
    )

    partials = pl.pallas_call(
        kernel,
        out_shape=jax.ShapeDtypeStruct((grid, _SUBLANES, _LANES), jnp.float32),
        grid_spec=pltpu.PrefetchScalarGridSpec(
            num_scalar_prefetch=0,
            grid=(grid,),
            in_specs=[
                pl.BlockSpec((tm, _LANES), lambda i: (i, 0)),
                pl.BlockSpec((tm, _LANES), lambda i: (i, 0)),
            ],
            out_specs=pl.BlockSpec((1, _SUBLANES, _LANES), lambda i: (i, 0, 0)),
        ),
        compiler_params=pltpu.CompilerParams(
            dimension_semantics=("parallel",),
        ),
        cost_estimate=cost,
    )(yh2d, y2d)

    total = jnp.sum(partials)  # tiny final reduce in plain XLA
    if reduction == "mean":
        return total / jnp.float32(n_elems)
    return total


def _mae_loss_ref(y_hat, y, reduction="mean"):
    scale = jnp.float32(_N_LEVELS - 1)
    disc = jnp.round(jnp.clip(y_hat.astype(jnp.float32), 0.0, 1.0) * scale) / scale
    l = jnp.abs(disc - y.astype(jnp.float32))
    return l.mean() if reduction == "mean" else l.sum()


if __name__ == "__main__":
    key = jax.random.PRNGKey(0)
    k1, k2, k3, k4 = jax.random.split(key, 4)

    # Small NCHW example (batch=2, channels=4, spatial=16x16).
    y_hat = jax.random.uniform(k1, (2, 4, 16, 16), dtype=jnp.float32)
    y = jax.random.uniform(k2, (2, 4, 16, 16), dtype=jnp.float32)

    out = jax.block_until_ready(mae_loss(y_hat, y, reduction="mean"))
    ref = _mae_loss_ref(y_hat, y, reduction="mean")
    assert jnp.allclose(out, ref, rtol=1e-5, atol=1e-6), (out, ref)

    out_s = jax.block_until_ready(mae_loss(y_hat, y, reduction="sum"))
    ref_s = _mae_loss_ref(y_hat, y, reduction="sum")
    assert jnp.allclose(out_s, ref_s, rtol=1e-5, atol=1e-5), (out_s, ref_s)

    # Larger ragged shape: exercises the lane-pad path and in-kernel tail mask
    # (multi-block grid with a partial last block).
    y_hat2 = jax.random.uniform(k3, (2, 4, 140, 140), dtype=jnp.float32)
    y2 = jax.random.uniform(k4, (2, 4, 140, 140), dtype=jnp.float32)
    out2 = jax.block_until_ready(mae_loss(y_hat2, y2, reduction="mean"))
    ref2 = _mae_loss_ref(y_hat2, y2, reduction="mean")
    assert jnp.allclose(out2, ref2, rtol=1e-5, atol=1e-6), (out2, ref2)

    print("KERNEL_OK")
</pallas_src>

<mosaic_0001>
module attributes {stable_mosaic.version = 11 : i64} {
  func.func @_mae_partial_kernel(%arg0: i32, %arg1: memref<16x128xf32, #tpu.memory_space<vmem>>, %arg2: memref<16x128xf32, #tpu.memory_space<vmem>>, %arg3: memref<1x8x128xf32, #tpu.memory_space<vmem>>) attributes {dimension_semantics = [#tpu.dimension_semantics<parallel>], iteration_bounds = array<i64: 1>, scalar_prefetch = 0 : i64, scratch_operands = 0 : i64, tpu.core_type = #tpu.core_type<tc>, window_params = [{transform_indices = @transform_0, window_bounds = array<i64: 16, 128>}, {transform_indices = @transform_1, window_bounds = array<i64: 16, 128>}, {transform_indices = @transform_2, window_bounds = array<i64: 1, 8, 128>}]} {
    %c0 = arith.constant 0 : index
    %c0_0 = arith.constant 0 : index
    %0 = vector.load %arg1[%c0, %c0_0] : memref<16x128xf32, #tpu.memory_space<vmem>>, vector<16x128xf32>
    %c0_1 = arith.constant 0 : index
    %c0_2 = arith.constant 0 : index
    %1 = vector.load %arg2[%c0_1, %c0_2] : memref<16x128xf32, #tpu.memory_space<vmem>>, vector<16x128xf32>
    %cst = arith.constant 0.000000e+00 : f32
    %cst_3 = arith.constant 1.000000e+00 : f32
    %2 = vector.broadcast %cst : f32 to vector<16x128xf32>
    %3 = arith.maximumf %2, %0 : vector<16x128xf32>
    %4 = vector.broadcast %cst_3 : f32 to vector<16x128xf32>
    %5 = arith.minimumf %4, %3 : vector<16x128xf32>
    %cst_4 = arith.constant 6.000000e+00 : f32
    %6 = vector.broadcast %cst_4 : f32 to vector<16x128xf32>
    %7 = arith.mulf %5, %6 : vector<16x128xf32>
    %8 = math.roundeven %7 : vector<16x128xf32>
    %cst_5 = arith.constant 6.000000e+00 : f32
    %9 = vector.broadcast %cst_5 : f32 to vector<16x128xf32>
    %10 = arith.divf %8, %9 : vector<16x128xf32>
    %11 = arith.subf %10, %1 : vector<16x128xf32>
    %12 = math.absf %11 : vector<16x128xf32>
    %13 = vector.shape_cast %12 : vector<16x128xf32> to vector<2x8x128xf32>
    %cst_6 = arith.constant dense<0.000000e+00> : vector<8x128xf32>
    %14 = vector.multi_reduction <add>, %13, %cst_6 [0] : vector<2x8x128xf32> to vector<8x128xf32>
    %c0_7 = arith.constant 0 : index
    %c0_8 = arith.constant 0 : index
    %c0_9 = arith.constant 0 : index
    %15 = vector.load %arg3[%c0_7, %c0_8, %c0_9] : memref<1x8x128xf32, #tpu.memory_space<vmem>>, vector<1x8x128xf32>
    %16 = vector.shape_cast %15 : vector<1x8x128xf32> to vector<8x128xf32>
    %17 = vector.shape_cast %14 : vector<8x128xf32> to vector<1x8x128xf32>
    tpu.vector_store %arg3[%c0_7, %c0_8, %c0_9], %17 {strides = array<i32>} : memref<1x8x128xf32, #tpu.memory_space<vmem>>, vector<1x8x128xf32>,
    return
  }
  func.func @transform_0(%arg0: i32) -> (i32, i32) {
    %c0_i32 = arith.constant 0 : i32
    %c0_i32_0 = arith.constant 0 : i32
    return %arg0, %c0_i32 : i32, i32
  }
  func.func @transform_1(%arg0: i32) -> (i32, i32) {
    %c0_i32 = arith.constant 0 : i32
    %c0_i32_0 = arith.constant 0 : i32
    return %arg0, %c0_i32 : i32, i32
  }
  func.func @transform_2(%arg0: i32) -> (i32, i32, i32) {
    %c0_i32 = arith.constant 0 : i32
    %c0_i32_0 = arith.constant 0 : i32
    %c0_i32_1 = arith.constant 0 : i32
    return %arg0, %c0_i32, %c0_i32_0 : i32, i32, i32
  }
}

</mosaic_0001>

<llo_original>
// kernel: tpu_custom_call.1
$region0: #{tpu_custom_call.1}
  #allocation0 [shape = 'u32[]', space=smem, size = 0x4, offset = 0x4, fixed_abs, tag = 'smem constant byte address 0x4 - core index']
  #allocation1 [shape = 'u32[144,128]{1,0:T(1,128)}', space=vmem, size = 0x12000, scoped, tag = 'internal scratch']
  %s0 = inlined_call_operand.hbm [shape: f32[16,128], index: 0, kind: input, shape index: {}]
  %s1 = inlined_call_operand.hbm [shape: f32[16,128], index: 1, kind: input, shape index: {}]
  %s2 = inlined_call_operand.hbm [shape: f32[1,8,128], index: 2, kind: output, shape index: {}]
  %s3 = sld [smem:[#allocation0]]
  $region26: #{tpu_custom_call.1} parent=0
    _
  %s5 = ssub.s32 1, %s3
  %s6 = scalar_select 0, %s5, %s3
  $region1: #{tpu_custom_call.1} parent=0
    #allocation2 [shape = 'u8[8192]{0}', space=vmem, size = 0x2000, scoped, tag = 'input window, operand 0, single buffered']
    #allocation3 [shape = 's32[1]{0}', space=sflag, size = 0x4, scoped, tag = 'scoped memory for tpu_custom_call.1']
    #allocation4 [shape = 's32[1]{0}', space=sflag, size = 0x4, scoped, tag = 'scoped memory for tpu_custom_call.1']
    #allocation5 [shape = 'u8[8192]{0}', space=vmem, size = 0x2000, scoped, tag = 'input window, operand 1, single buffered']
    #allocation6 [shape = 's32[1]{0}', space=sflag, size = 0x4, scoped, tag = 'scoped memory for tpu_custom_call.1']
    #allocation7 [shape = 'u8[4096]{0}', space=vmem, size = 0x1000, scoped, tag = 'output window, operand 0, single buffered']
    %7 = vsyncpa [#allocation3], 0
    %8 = vsyncpa [#allocation6], 0
    %9 = vsyncpa [#allocation4], 0
    // Predicated region
    $region2: #{tpu_custom_call.1} parent=1 // pred_check
      _
    $region3: #{tpu_custom_call.1} parent=1 // pred_check_branch
      %11 = sbr.rel (0) target = $region5
    $region4: #{tpu_custom_call.1} parent=1 // pred_region
      %s13 = ssub.s32 256, 256
      %14 = vsyncadd [#allocation3], %s13
      %s15 = sshll.u32 [#allocation2], 4
      %s16 = int_to_ptr.vmem [resolvable:$true] %s15
      %21 = dma.hbm_to_vmem [thread:$0]  %s0, 256, %s16, [#allocation3], 128, 128, 8
    $region5: #{tpu_custom_call.1} parent=1 // pred_fallthru
      _
    // Predicated region
    $region6: #{tpu_custom_call.1} parent=1 // pred_check
      _
    $region7: #{tpu_custom_call.1} parent=1 // pred_check_branch
      %23 = sbr.rel (0) target = $region9
    $region8: #{tpu_custom_call.1} parent=1 // pred_region
      %s25 = ssub.s32 256, 256
      %26 = vsyncadd [#allocation6], %s25
      %s27 = sshll.u32 [#allocation5], 4
      %s28 = int_to_ptr.vmem [resolvable:$true] %s27
      %33 = dma.hbm_to_vmem [thread:$0]  %s1, 256, %s28, [#allocation6], 128, 128, 8
    $region9: #{tpu_custom_call.1} parent=1 // pred_fallthru
      _
    // Predicated region
    $region10: #{tpu_custom_call.1} parent=1 // pred_check
      _
    $region11: #{tpu_custom_call.1} parent=1 // pred_check_branch
      %35 = sbr.rel (0) target = $region13
    $region12: #{tpu_custom_call.1} parent=1 // pred_region
      %36 = dma.done [#allocation3], 256
    $region13: #{tpu_custom_call.1} parent=1 // pred_fallthru
      _
    // Predicated region
    $region14: #{tpu_custom_call.1} parent=1 // pred_check
      _
    $region15: #{tpu_custom_call.1} parent=1 // pred_check_branch
      %38 = sbr.rel (0) target = $region17
    $region16: #{tpu_custom_call.1} parent=1 // pred_region
      %39 = dma.done [#allocation6], 256
    $region17: #{tpu_custom_call.1} parent=1 // pred_fallthru
      _
    %v40 = vld [vmem:[#allocation2] sm:$0xff]
    %v41 = vld [vmem:[#allocation2 + $0x8] sm:$0xff]
    %v42 = vld [vmem:[#allocation5] sm:$0xff]
    %v43 = vld [vmem:[#allocation5 + $0x8] sm:$0xff]
    %v44 = vmax.f32 %v40, 0.0
    %v45 = vmax.f32 %v41, 0.0
    %v46 = vmin.f32 %v44, 1.0
    %v47 = vmin.f32 %v45, 1.0
    %v48 = vmul.f32 %v46, 6.0
    %v49 = vmul.f32 %v47, 6.0
    %v50 = vround.ne.pseudo %v48
    %v51 = vround.ne.pseudo %v49
    %v52 = vrcp.pop 6.0
    %v53 = vmul.f32 %v50, %v52
    %v54 = vmul.f32 %v51, %v52
    %v55 = vsub.f32 %v53, %v42
    %v56 = vsub.f32 %v54, %v43
    %v57 = vand.u32 2147483647, %v55
    %v58 = vand.u32 2147483647, %v56
    %v59 = vadd.f32 %v57, %v58
    %60 = vst [vmem:[#allocation7] sm:$0xff] %v59
    // Predicated region
    $region18: #{tpu_custom_call.1} parent=1 // pred_check
      _
    $region19: #{tpu_custom_call.1} parent=1 // pred_check_branch
      %62 = sbr.rel (0) target = $region21
    $region20: #{tpu_custom_call.1} parent=1 // pred_region
      %s64 = ssub.s32 128, 128
      %65 = vsyncadd [#allocation4], %s64
      %s67 = sshll.u32 [#allocation7], 4
      %s68 = int_to_ptr.vmem [resolvable:$true] %s67
      %70 = dma.vmem_to_hbm [thread:$0]  %s68, 128, %s2, [#allocation4]
    $region21: #{tpu_custom_call.1} parent=1 // pred_fallthru
      _
    // Predicated region
    $region22: #{tpu_custom_call.1} parent=1 // pred_check
      _
    $region23: #{tpu_custom_call.1} parent=1 // pred_check_branch
      %72 = sbr.rel (0) target = $region25
    $region24: #{tpu_custom_call.1} parent=1 // pred_region
      %73 = dma.done [#allocation4], 128
    $region25: #{tpu_custom_call.1} parent=1 // pred_fallthru
      _
    %74 = vsyncpa [#allocation3], 1
    %75 = vsyncpa [#allocation6], 1
    %76 = vsyncpa [#allocation4], 1

</llo_original>
